<compile_context>
chip_gen: v7x
topology: tpu7x:2x2x1
jax: 0.10.0
libtpu: 0.0.40
codegen_flags: <defaults>
</compile_context>

<pallas_src>
import math
import functools

import jax
import jax.numpy as jnp
from jax import lax
from jax.experimental import pallas as pl
from jax.experimental.pallas import tpu as pltpu


def _fc_kernel(x_ref, w_ref, o_ref):
    """Single-shot y = x @ W.T on whole-array VMEM blocks.

    x_ref: (M, D_in)          activations
    w_ref: (D_out_pad, D_in)  bias-free linear weight (un-transposed, lane-padded)
    o_ref: (M, D_out_pad)     output
    """
    o_ref[...] = lax.dot_general(
        x_ref[...],
        w_ref[...],
        dimension_numbers=(((1,), (1,)), ((), ())),  # contract D_in of both => x @ W.T
        preferred_element_type=jnp.float32,
    ).astype(o_ref.dtype)


@functools.partial(jax.jit, static_argnames=())
def manifold_fc_forward(x, weight):
    """Pallas implementation of ManifoldFcLayer.forward (inference path).

    x:      (N, C, H, W) float32
    weight: (D_out, H*W) float32   (nn.Linear weight layout, bias-free)
    returns (N, C, sqrt(D_out), sqrt(D_out)) float32
    """
    n, c, h, w = x.shape
    d_in = h * w
    d_out = weight.shape[0]
    assert weight.shape[1] == d_in
    s = int(math.isqrt(d_out))
    assert s * s == d_out, "output feature count must be a perfect square"

    m = n * c
    x2d = x.reshape(m, d_in)

    # Lane-dense output: pad the out-feature dim up to a multiple of 128 so the
    # kernel's stores are full, unmasked vregs.  Zero rows in the weight produce
    # zero output columns which are sliced off below.
    d_out_pad = ((d_out + 127) // 128) * 128
    if d_out_pad != d_out:
        w_in = jnp.pad(weight, ((0, d_out_pad - d_out), (0, 0)))
    else:
        w_in = weight

    # Whole problem must fit in VMEM (it does by a huge margin at these shapes);
    # larger workloads would need an M-tiled, K-tiled grid instead.
    total_bytes = 4 * (m * d_in + d_out_pad * d_in + m * d_out_pad)
    assert total_bytes < (16 << 20), "problem too large for single-shot VMEM kernel"

    y2d = pl.pallas_call(
        _fc_kernel,
        out_shape=jax.ShapeDtypeStruct((m, d_out_pad), x.dtype),
        in_specs=[
            pl.BlockSpec(memory_space=pltpu.MemorySpace.VMEM),  # whole x2d in VMEM
            pl.BlockSpec(memory_space=pltpu.MemorySpace.VMEM),  # whole weight in VMEM
        ],
        out_specs=pl.BlockSpec(memory_space=pltpu.MemorySpace.VMEM),
    )(x2d, w_in)

    if d_out_pad != d_out:
        y2d = y2d[:, :d_out]
    return y2d.reshape(n, c, s, s)


if __name__ == "__main__":
    # Small shapes consistent with the module's forward:
    #   x: (N=2, C=4, H=16, W=16)  ->  D_in = 256
    #   D_out = 64 (perfect square) -> output spatial 8x8
    N, C, H, W = 2, 4, 16, 16
    D_IN = H * W
    D_OUT = 64

    key = jax.random.PRNGKey(0)
    kx, kw = jax.random.split(key)
    x = jax.random.normal(kx, (N, C, H, W), dtype=jnp.float32)
    # Deterministic stand-in for the manifold-reduction matrix M
    # (nn.Linear weight layout: (out_features, in_features), no bias).
    weight = jax.random.normal(kw, (D_OUT, D_IN), dtype=jnp.float32) * (
        1.0 / math.sqrt(D_IN)
    )
    # TODO(synk): the `train=True` branch (running ReductionMethod on host
    # numpy data to build M) is data-dependent host code with no Pallas
    # equivalent; only the FC forward hot path is implemented here.

    y = manifold_fc_forward(x, weight)
    jax.block_until_ready(y)

    # Cross-check against plain JAX reference.
    ref = (x.reshape(N * C, D_IN) @ weight.T).reshape(
        N, C, int(math.isqrt(D_OUT)), int(math.isqrt(D_OUT))
    )
    assert y.shape == (N, C, 8, 8)
    assert jnp.allclose(y, ref, atol=1e-4, rtol=1e-4)

    print("KERNEL_OK")
</pallas_src>

<mosaic_0001>
module attributes {stable_mosaic.version = 11 : i64} {
  func.func @_fc_kernel(%arg0: memref<8x256xf32, #tpu.memory_space<vmem>>, %arg1: memref<128x256xf32, #tpu.memory_space<vmem>>, %arg2: memref<8x128xf32, #tpu.memory_space<vmem>>) attributes {dimension_semantics = [], scalar_prefetch = 0 : i64, scratch_operands = 0 : i64, tpu.core_type = #tpu.core_type<tc>} {
    %c0 = arith.constant 0 : index
    %c0_0 = arith.constant 0 : index
    %0 = vector.load %arg0[%c0, %c0_0] : memref<8x256xf32, #tpu.memory_space<vmem>>, vector<8x256xf32>
    %c0_1 = arith.constant 0 : index
    %c0_2 = arith.constant 0 : index
    %1 = vector.load %arg1[%c0_1, %c0_2] : memref<128x256xf32, #tpu.memory_space<vmem>>, vector<128x256xf32>
    %cst = arith.constant dense<0.000000e+00> : vector<8x128xf32>
    %2 = tpu.matmul %0, %1, %cst {dimension_numbers = #tpu.dot_dimension_numbers<[1], [1], [0], [0], [0, 0, 1, 0], [], []>} : vector<8x256xf32>, vector<128x256xf32>, vector<8x128xf32> -> vector<8x128xf32>
    %c0_3 = arith.constant 0 : index
    %c0_4 = arith.constant 0 : index
    %3 = vector.load %arg2[%c0_3, %c0_4] : memref<8x128xf32, #tpu.memory_space<vmem>>, vector<8x128xf32>
    tpu.vector_store %arg2[%c0_3, %c0_4], %2 {strides = array<i32>} : memref<8x128xf32, #tpu.memory_space<vmem>>, vector<8x128xf32>,
    return
  }
}

</mosaic_0001>

<llo_original>
// kernel: manifold_fc_forward.1
$region0: #{manifold_fc_forward.1}
  #allocation0 [shape = 'u32[]', space=smem, size = 0x4, offset = 0x4, fixed_abs, tag = 'smem constant byte address 0x4 - core index']
  #allocation1 [shape = 'u32[144,128]{1,0:T(1,128)}', space=vmem, size = 0x12000, scoped, tag = 'internal scratch']
  %s0 = inlined_call_operand.vmem [shape: f32[8,256], index: 0, kind: input, shape index: {}]
  %s1 = inlined_call_operand.vmem [shape: f32[128,256], index: 1, kind: input, shape index: {}]
  %s2 = inlined_call_operand.vmem [shape: f32[8,128], index: 2, kind: output, shape index: {}]
  %s3 = sld [smem:[#allocation0]]
  $region18: #{manifold_fc_forward.1} parent=0
    _
  %s5 = ssub.s32 1, %s3
  %s6 = scalar_select 0, %s5, %s3
  // Predicated region
  $region2: #{manifold_fc_forward.1} parent=0 // pred_check
    _
  $region3: #{manifold_fc_forward.1} parent=0 // pred_check_branch
    %8 = sbr.rel (0) target = $region5
  $region4: #{manifold_fc_forward.1} parent=0 // pred_region
    _
  $region5: #{manifold_fc_forward.1} parent=0 // pred_fallthru
    _
  // Predicated region
  $region6: #{manifold_fc_forward.1} parent=0 // pred_check
    _
  $region7: #{manifold_fc_forward.1} parent=0 // pred_check_branch
    %10 = sbr.rel (0) target = $region9
  $region8: #{manifold_fc_forward.1} parent=0 // pred_region
    _
  $region9: #{manifold_fc_forward.1} parent=0 // pred_fallthru
    _
  %v11 = vld [vmem:[%s0] sm:$0xff]
  %v12 = vld [vmem:[%s0 + $0x8] sm:$0xff]
  %v13 = vld [vmem:[%s1] sm:$0xff]
  %v14 = vld [vmem:[%s1 + $0x8] sm:$0xff]
  %v15 = vld [vmem:[%s1 + $0x10] sm:$0xff]
  %v16 = vld [vmem:[%s1 + $0x18] sm:$0xff]
  %v17 = vld [vmem:[%s1 + $0x20] sm:$0xff]
  %v18 = vld [vmem:[%s1 + $0x28] sm:$0xff]
  %v19 = vld [vmem:[%s1 + $0x30] sm:$0xff]
  %v20 = vld [vmem:[%s1 + $0x38] sm:$0xff]
  %v21 = vld [vmem:[%s1 + $0x40] sm:$0xff]
  %v22 = vld [vmem:[%s1 + $0x48] sm:$0xff]
  %v23 = vld [vmem:[%s1 + $0x50] sm:$0xff]
  %v24 = vld [vmem:[%s1 + $0x58] sm:$0xff]
  %v25 = vld [vmem:[%s1 + $0x60] sm:$0xff]
  %v26 = vld [vmem:[%s1 + $0x68] sm:$0xff]
  %v27 = vld [vmem:[%s1 + $0x70] sm:$0xff]
  %v28 = vld [vmem:[%s1 + $0x78] sm:$0xff]
  %v29 = vld [vmem:[%s1 + $0x80] sm:$0xff]
  %v30 = vld [vmem:[%s1 + $0x88] sm:$0xff]
  %v31 = vld [vmem:[%s1 + $0x90] sm:$0xff]
  %v32 = vld [vmem:[%s1 + $0x98] sm:$0xff]
  %v33 = vld [vmem:[%s1 + $0xa0] sm:$0xff]
  %v34 = vld [vmem:[%s1 + $0xa8] sm:$0xff]
  %v35 = vld [vmem:[%s1 + $0xb0] sm:$0xff]
  %v36 = vld [vmem:[%s1 + $0xb8] sm:$0xff]
  %v37 = vld [vmem:[%s1 + $0xc0] sm:$0xff]
  %v38 = vld [vmem:[%s1 + $0xc8] sm:$0xff]
  %v39 = vld [vmem:[%s1 + $0xd0] sm:$0xff]
  %v40 = vld [vmem:[%s1 + $0xd8] sm:$0xff]
  %v41 = vld [vmem:[%s1 + $0xe0] sm:$0xff]
  %v42 = vld [vmem:[%s1 + $0xe8] sm:$0xff]
  %v43 = vld [vmem:[%s1 + $0xf0] sm:$0xff]
  %v44 = vld [vmem:[%s1 + $0xf8] sm:$0xff]
  %45 = vmatprep.subr.mxu0 %v14
  %46 = vmatpush1.xpose.msra.mxu0 %v13
  %47 = vmatprep.subr.mxu0 %v16
  %48 = vmatpush1.xpose.msra.mxu0 %v15
  %49 = vmatprep.subr.mxu0 %v18
  %50 = vmatpush1.xpose.msra.mxu0 %v17
  %51 = vmatprep.subr.mxu0 %v20
  %52 = vmatpush1.xpose.msra.mxu0 %v19
  %53 = vmatprep.subr.mxu0 %v22
  %54 = vmatpush1.xpose.msra.mxu0 %v21
  %55 = vmatprep.subr.mxu0 %v24
  %56 = vmatpush1.xpose.msra.mxu0 %v23
  %57 = vmatprep.subr.mxu0 %v26
  %58 = vmatpush1.xpose.msra.mxu0 %v25
  %59 = vmatprep.subr.mxu0 %v28
  %60 = vmatpush1.xpose.msra.mxu0 %v27
  %61 = vmatprep.subr.mxu0 %v30
  %62 = vmatpush1.xpose.msra.mxu0 %v29
  %63 = vmatprep.subr.mxu0 %v32
  %64 = vmatpush1.xpose.msra.mxu0 %v31
  %65 = vmatprep.subr.mxu0 %v34
  %66 = vmatpush1.xpose.msra.mxu0 %v33
  %67 = vmatprep.subr.mxu0 %v36
  %68 = vmatpush1.xpose.msra.mxu0 %v35
  %69 = vmatprep.subr.mxu0 %v38
  %70 = vmatpush1.xpose.msra.mxu0 %v37
  %71 = vmatprep.subr.mxu0 %v40
  %72 = vmatpush1.xpose.msra.mxu0 %v39
  %73 = vmatprep.subr.mxu0 %v42
  %74 = vmatpush1.xpose.msra.mxu0 %v41
  %75 = vmatprep.subr.mxu0 %v44
  %76 = vmatpush1.xpose.msra.mxu0 %v43
  %77 = vmatprep.subr.mxu0 0.0
  %78 = vmatpush1.xpose.msra.mxu0 0.0
  %79 = vmatprep.subr.mxu0 0.0
  %80 = vmatpush1.xpose.msra.mxu0 0.0
  %81 = vmatprep.subr.mxu0 0.0
  %82 = vmatpush1.xpose.msra.mxu0 0.0
  %83 = vmatprep.subr.mxu0 0.0
  %84 = vmatpush1.xpose.msra.mxu0 0.0
  %85 = vmatprep.subr.mxu0 0.0
  %86 = vmatpush1.xpose.msra.mxu0 0.0
  %87 = vmatprep.subr.mxu0 0.0
  %88 = vmatpush1.xpose.msra.mxu0 0.0
  %89 = vmatprep.subr.mxu0 0.0
  %90 = vmatpush1.xpose.msra.mxu0 0.0
  %91 = vmatprep.subr.mxu0 0.0
  %92 = vmatpush1.xpose.msra.mxu0 0.0
  %93 = vmatprep.subr.mxu0 0.0
  %94 = vmatpush1.xpose.msra.mxu0 0.0
  %95 = vmatprep.subr.mxu0 0.0
  %96 = vmatpush1.xpose.msra.mxu0 0.0
  %97 = vmatprep.subr.mxu0 0.0
  %98 = vmatpush1.xpose.msra.mxu0 0.0
  %99 = vmatprep.subr.mxu0 0.0
  %100 = vmatpush1.xpose.msra.mxu0 0.0
  %101 = vmatprep.subr.mxu0 0.0
  %102 = vmatpush1.xpose.msra.mxu0 0.0
  %103 = vmatprep.subr.mxu0 0.0
  %104 = vmatpush1.xpose.msra.mxu0 0.0
  %105 = vmatprep.subr.mxu0 0.0
  %106 = vmatpush1.xpose.msra.mxu0 0.0
  %107 = vmatprep.subr.mxu0 0.0
  %108 = vmatpush1.xpose.msra.mxu0 0.0
  %109 = vmatprep.mubr.f32.mxu0 %v12
  %110 = vmatmul.mubr.f32.gmra.mrb[0].mxu0 %v11
  %v111 = vpop.f32.mrb[0].mxu0
  %v112 = vadd.f32 0.0, %v111
  %v113 = vpop.f32.mrb[0].mxu0
  %114 = vdwg.mxu0
  %115 = vst [vmem:[%s2] sm:$0xff] %v112
  // Predicated region
  $region10: #{manifold_fc_forward.1} parent=0 // pred_check
    _
  $region11: #{manifold_fc_forward.1} parent=0 // pred_check_branch
    %117 = sbr.rel (0) target = $region13
  $region12: #{manifold_fc_forward.1} parent=0 // pred_region
    _
  $region13: #{manifold_fc_forward.1} parent=0 // pred_fallthru
    _
  // Predicated region
  $region14: #{manifold_fc_forward.1} parent=0 // pred_check
    _
  $region15: #{manifold_fc_forward.1} parent=0 // pred_check_branch
    %119 = sbr.rel (0) target = $region17
  $region16: #{manifold_fc_forward.1} parent=0 // pred_region
    _
  $region17: #{manifold_fc_forward.1} parent=0 // pred_fallthru
    _

</llo_original>
